<compile_context>
chip_gen: v5e
topology: v5e:2x2
jax: 0.10.0
libtpu: 0.0.40
codegen_flags: <defaults>
</compile_context>

<pallas_src>
import jax
import jax.numpy as jnp
from jax import lax
from jax.experimental import pallas as pl
from jax.experimental.pallas import tpu as pltpu


# --------------------------------------------------------------------------
# Kernel
# --------------------------------------------------------------------------
def hazard_kernel(x_ref, w1T_ref, b1_ref, w2_ref, b2_ref, o_ref):
    # Layer 1: contract over D; batch lands on the 128-lane axis.
    #   (H, D) x (tile_n, D) -> (H, tile_n), fp32 MXU accumulation.
    # x arrives row-major (tile_n, D); the transposed-RHS feed is handled by
    # the MXU / XLU path, which is otherwise idle in this kernel.
    h = lax.dot_general(
        w1T_ref[...], x_ref[...],
        dimension_numbers=(((1,), (1,)), ((), ())),
        preferred_element_type=jnp.float32)
    h = jnp.maximum(h + b1_ref[...], 0.0)          # bias + ReLU (VPU, fp32)

    # Dropout(p=0.5): identity at eval time.
    # BatchNorm1d (running stats) is folded into (w2, b2) at wrapper time.
    # Final Linear(H, 1, bias=False): per-hidden scale (VPU) + cross-sublane
    # sum over H (XLU) instead of an M=1 MXU matmul; output is lane-dense.
    out = jnp.sum(h * w2_ref[...], axis=0, keepdims=True) + b2_ref[...]
    o_ref[...] = out.astype(o_ref.dtype)


# --------------------------------------------------------------------------
# Parameter folding (eval-mode BN -> final linear)
# --------------------------------------------------------------------------
def fold_params(params, eps=1e-5, compute_dtype=jnp.float32):
    a = params["gamma"] * lax.rsqrt(params["running_var"] + eps)       # (H,)
    w2 = params["w2"][:, 0]                                            # (H,)
    w2c = (a * w2).astype(jnp.float32)[:, None]                        # (H, 1)
    b2f = jnp.sum((params["beta"] - params["running_mean"] * a) * w2)
    b2f = b2f.reshape(1, 1).astype(jnp.float32)                        # (1, 1)
    w1T = params["w1"].T.astype(compute_dtype)                         # (H, D)
    b1c = params["b1"].astype(jnp.float32)[:, None]                    # (H, 1)
    return w1T, b1c, w2c, b2f


# --------------------------------------------------------------------------
# Tile / VMEM sizing
# --------------------------------------------------------------------------
def _vmem_limit_bytes():
    try:
        cap = int(getattr(pltpu.get_tpu_info(), "vmem_capacity_bytes", 0))
        if cap <= 0:
            cap = 64 << 20
    except Exception:
        cap = 64 << 20          # conservative: v7x physical VMEM per core
    # ~96 MiB on 128 MiB parts (v5e/v6e), ~48 MiB on 64 MiB parts (v7x).
    return min((cap * 3) // 4, 100 << 20)


def _choose_tile_n(N, D, H, x_itemsize, vmem_limit):
    # Per-lane (per batch column) VMEM footprint of one pipeline step:
    #   double-buffered x block + fp32 h intermediate + relayout/epilogue slack.
    per_lane = 2 * D * x_itemsize + H * 4 + D * 4 + 32
    budget = vmem_limit // 2                 # leave headroom for compiler scratch
    tile = budget // per_lane
    tile = min(tile, 32 * 1024)              # step overhead long since amortized
    # Keep >= ~4 grid steps on big batches so v7x's two TensorCores share the
    # work; never shrink below 1024 lanes for this reason.
    quarter = 128 * pl.cdiv(pl.cdiv(N, 4), 128)
    if quarter >= 1024:
        tile = min(tile, quarter)
    tile = min(tile, 128 * pl.cdiv(N, 128))  # no bigger than the padded batch
    tile = max(128, (tile // 128) * 128)     # lane-aligned
    return int(tile)


# --------------------------------------------------------------------------
# Wrapper
# --------------------------------------------------------------------------
def hazard_regression(x, params, *, eps=1e-5, tile_n=None):
    """x: (N, D) float32 or bfloat16. Returns (N, 1) float32 (eval forward)."""
    N, D = x.shape
    w1T, b1c, w2c, b2f = fold_params(params, eps=eps, compute_dtype=x.dtype)
    H = w1T.shape[0]

    vmem_limit = _vmem_limit_bytes()
    if tile_n is None:
        tile_n = _choose_tile_n(N, D, H, jnp.dtype(x.dtype).itemsize, vmem_limit)
    else:
        tile_n = max(128, (int(tile_n) // 128) * 128)

    n_pad = tile_n * pl.cdiv(N, tile_n)
    if n_pad != N:
        # Pad only to the next tile boundary; a no-op when N is tile-aligned.
        x = jnp.pad(x, ((0, n_pad - N), (0, 0)))

    out = pl.pallas_call(
        hazard_kernel,
        out_shape=jax.ShapeDtypeStruct((1, n_pad), jnp.float32),
        grid=(n_pad // tile_n,),
        in_specs=[
            # x tiles stream HBM->VMEM (double-buffered) in native layout.
            pl.BlockSpec((tile_n, D), lambda i: (i, 0)),
            # Weights / folded biases: constant index_map -> VMEM-resident.
            pl.BlockSpec((H, D), lambda i: (0, 0)),
            pl.BlockSpec((H, 1), lambda i: (0, 0)),
            pl.BlockSpec((H, 1), lambda i: (0, 0)),
            pl.BlockSpec((1, 1), lambda i: (0, 0)),
        ],
        out_specs=pl.BlockSpec((1, tile_n), lambda i: (0, i)),
        compiler_params=pltpu.CompilerParams(
            dimension_semantics=("parallel",),
            vmem_limit_bytes=int(vmem_limit)),
    )(x, w1T, b1c, w2c, b2f)

    # Drop padded columns, restore torch (N, 1) output layout.
    return out[0, :N][:, None]


# --------------------------------------------------------------------------
# Init + reference
# --------------------------------------------------------------------------
def init_params(key, input_dimension, hidden_layer_size=32):
    """Torch-like Linear init; BN params/stats randomized so the BN->Linear
    fold is actually exercised by the correctness check."""
    D, H = input_dimension, hidden_layer_size
    k1, k2, k3, k4, k5, k6, k7 = jax.random.split(key, 7)
    lim1 = 1.0 / jnp.sqrt(jnp.float32(D))
    lim2 = 1.0 / jnp.sqrt(jnp.float32(H))
    return {
        # stored transposed relative to torch.nn.Linear.weight: (D, H)
        "w1": jax.random.uniform(k1, (D, H), jnp.float32, -lim1, lim1),
        "b1": jax.random.uniform(k2, (H,), jnp.float32, -lim1, lim1),
        "gamma": jax.random.uniform(k3, (H,), jnp.float32, 0.5, 1.5),
        "beta": jax.random.normal(k4, (H,), jnp.float32) * 0.1,
        "running_mean": jax.random.normal(k5, (H,), jnp.float32) * 0.1,
        "running_var": jax.random.uniform(k6, (H,), jnp.float32, 0.5, 1.5),
        # final Linear(H, 1, bias=False), stored as (H, 1)
        "w2": jax.random.uniform(k7, (H, 1), jnp.float32, -lim2, lim2),
    }


def reference_forward(x, p, eps=1e-5):
    """Pure-JAX reference of the (unfolded) eval-mode forward."""
    h = jnp.maximum(x @ p["w1"] + p["b1"], 0.0)
    bn = ((h - p["running_mean"]) * lax.rsqrt(p["running_var"] + eps)
          * p["gamma"] + p["beta"])
    return bn @ p["w2"]


if __name__ == "__main__":
    key = jax.random.PRNGKey(0)
    k_params, k_x = jax.random.split(key)

    D, H = 16, 32              # input_dimension=16, hidden_layer_size=32
    params = init_params(k_params, D, H)

    # 1) Small batch (single tile, padded to 128 lanes).
    x_small = jax.random.normal(k_x, (8, D), jnp.float32)
    out = jax.block_until_ready(hazard_regression(x_small, params))
    ref = reference_forward(x_small, params)
    assert out.shape == (8, 1)
    assert jnp.allclose(out, ref, atol=1e-4, rtol=1e-4)

    # 2) Multi-step grid + partially padded last tile (streaming path).
    x_big = jax.random.normal(jax.random.PRNGKey(1), (300, D), jnp.float32)
    out_big = jax.block_until_ready(hazard_regression(x_big, params, tile_n=128))
    ref_big = reference_forward(x_big, params)
    assert out_big.shape == (300, 1)
    assert jnp.allclose(out_big, ref_big, atol=1e-4, rtol=1e-4)

    # 3) Optional bf16 layer-1 path (fp32 accumulation); looser tolerance.
    out_bf16 = jax.block_until_ready(
        hazard_regression(x_big.astype(jnp.bfloat16), params, tile_n=128))
    assert jnp.allclose(out_bf16, ref_big, atol=5e-2, rtol=5e-2)

    print("KERNEL_OK")
</pallas_src>

<mosaic_0001>
module attributes {stable_mosaic.version = 11 : i64} {
  func.func @hazard_kernel(%arg0: i32, %arg1: memref<128x16xf32, #tpu.memory_space<vmem>>, %arg2: memref<32x16xf32, #tpu.memory_space<vmem>>, %arg3: memref<32x1xf32, #tpu.memory_space<vmem>>, %arg4: memref<32x1xf32, #tpu.memory_space<vmem>>, %arg5: memref<1x1xf32, #tpu.memory_space<vmem>>, %arg6: memref<1x128xf32, #tpu.memory_space<vmem>>) attributes {dimension_semantics = [#tpu.dimension_semantics<parallel>], iteration_bounds = array<i64: 1>, scalar_prefetch = 0 : i64, scratch_operands = 0 : i64, tpu.core_type = #tpu.core_type<tc>, window_params = [{transform_indices = @transform_0, window_bounds = array<i64: 128, 16>}, {pipeline_mode = #tpu.pipeline_mode<synchronous>, transform_indices = @transform_1, window_bounds = array<i64: 32, 16>}, {pipeline_mode = #tpu.pipeline_mode<synchronous>, transform_indices = @transform_2, window_bounds = array<i64: 32, 1>}, {pipeline_mode = #tpu.pipeline_mode<synchronous>, transform_indices = @transform_3, window_bounds = array<i64: 32, 1>}, {pipeline_mode = #tpu.pipeline_mode<synchronous>, transform_indices = @transform_4, window_bounds = array<i64: 1, 1>}, {transform_indices = @transform_5, window_bounds = array<i64: 1, 128>}]} {
    %c0 = arith.constant 0 : index
    %c0_0 = arith.constant 0 : index
    %0 = vector.load %arg2[%c0, %c0_0] : memref<32x16xf32, #tpu.memory_space<vmem>>, vector<32x16xf32>
    %c0_1 = arith.constant 0 : index
    %c0_2 = arith.constant 0 : index
    %1 = vector.load %arg1[%c0_1, %c0_2] : memref<128x16xf32, #tpu.memory_space<vmem>>, vector<128x16xf32>
    %cst = arith.constant dense<0.000000e+00> : vector<32x128xf32>
    %2 = tpu.matmul %0, %1, %cst {dimension_numbers = #tpu.dot_dimension_numbers<[1], [1], [0], [0], [0, 0, 1, 0], [], []>} : vector<32x16xf32>, vector<128x16xf32>, vector<32x128xf32> -> vector<32x128xf32>
    %c0_3 = arith.constant 0 : index
    %c0_4 = arith.constant 0 : index
    %3 = vector.load %arg3[%c0_3, %c0_4] : memref<32x1xf32, #tpu.memory_space<vmem>>, vector<32x1xf32>
    %4 = vector.broadcast %3 : vector<32x1xf32> to vector<32x128xf32>
    %5 = arith.addf %2, %4 : vector<32x128xf32>
    %cst_5 = arith.constant 0.000000e+00 : f32
    %6 = vector.broadcast %cst_5 : f32 to vector<32x128xf32>
    %7 = arith.maximumf %5, %6 : vector<32x128xf32>
    %c0_6 = arith.constant 0 : index
    %c0_7 = arith.constant 0 : index
    %8 = vector.load %arg4[%c0_6, %c0_7] : memref<32x1xf32, #tpu.memory_space<vmem>>, vector<32x1xf32>
    %9 = vector.broadcast %8 : vector<32x1xf32> to vector<32x128xf32>
    %10 = arith.mulf %7, %9 : vector<32x128xf32>
    %cst_8 = arith.constant dense<0.000000e+00> : vector<128xf32>
    %11 = vector.multi_reduction <add>, %10, %cst_8 [0] : vector<32x128xf32> to vector<128xf32>
    %12 = vector.shape_cast %11 : vector<128xf32> to vector<1x128xf32>
    %c0_9 = arith.constant 0 : index
    %c0_10 = arith.constant 0 : index
    %13 = vector.load %arg5[%c0_9, %c0_10] : memref<1x1xf32, #tpu.memory_space<vmem>>, vector<1x1xf32>
    %14 = vector.broadcast %13 : vector<1x1xf32> to vector<1x128xf32>
    %15 = arith.addf %12, %14 : vector<1x128xf32>
    %c0_11 = arith.constant 0 : index
    %c0_12 = arith.constant 0 : index
    %16 = vector.load %arg6[%c0_11, %c0_12] : memref<1x128xf32, #tpu.memory_space<vmem>>, vector<1x128xf32>
    tpu.vector_store %arg6[%c0_11, %c0_12], %15 {strides = array<i32>} : memref<1x128xf32, #tpu.memory_space<vmem>>, vector<1x128xf32>,
    return
  }
  func.func @transform_0(%arg0: i32) -> (i32, i32) {
    %c0_i32 = arith.constant 0 : i32
    %c0_i32_0 = arith.constant 0 : i32
    return %arg0, %c0_i32 : i32, i32
  }
  func.func @transform_1(%arg0: i32) -> (i32, i32) {
    %c0_i32 = arith.constant 0 : i32
    %c0_i32_0 = arith.constant 0 : i32
    %c0_i32_1 = arith.constant 0 : i32
    return %c0_i32, %c0_i32_0 : i32, i32
  }
  func.func @transform_2(%arg0: i32) -> (i32, i32) {
    %c0_i32 = arith.constant 0 : i32
    %c0_i32_0 = arith.constant 0 : i32
    %c0_i32_1 = arith.constant 0 : i32
    return %c0_i32, %c0_i32_0 : i32, i32
  }
  func.func @transform_3(%arg0: i32) -> (i32, i32) {
    %c0_i32 = arith.constant 0 : i32
    %c0_i32_0 = arith.constant 0 : i32
    %c0_i32_1 = arith.constant 0 : i32
    return %c0_i32, %c0_i32_0 : i32, i32
  }
  func.func @transform_4(%arg0: i32) -> (i32, i32) {
    %c0_i32 = arith.constant 0 : i32
    %c0_i32_0 = arith.constant 0 : i32
    %c0_i32_1 = arith.constant 0 : i32
    return %c0_i32, %c0_i32_0 : i32, i32
  }
  func.func @transform_5(%arg0: i32) -> (i32, i32) {
    %c0_i32 = arith.constant 0 : i32
    %c0_i32_0 = arith.constant 0 : i32
    return %c0_i32, %arg0 : i32, i32
  }
}

</mosaic_0001>

<llo_original>
// kernel: tpu_custom_call.1
$region0: #{tpu_custom_call.1}
  #allocation0 [shape = 'u32[]', space=smem, size = 0x4, offset = 0x4, fixed_abs, tag = 'smem constant byte address 0x4 - core index']
  #allocation1 [shape = 'u32[72,128]{1,0:T(1,128)}', space=vmem, size = 0x9000, scoped, tag = 'internal scratch']
  #allocation2 [shape = 'f32[1,1]{1,0:T(1,128)S(1)}', space=vmem, size = 0x200, scoped, tag = 'scoped memory for tpu_custom_call.1']
  %s0 = inlined_call_operand.vmem [shape: f32[128,16], index: 0, kind: input, shape index: {}]
  %s1 = inlined_call_operand.vmem [shape: f32[32,16], index: 1, kind: input, shape index: {}]
  %s2 = inlined_call_operand.vmem [shape: f32[32,1], index: 2, kind: input, shape index: {}]
  %s3 = inlined_call_operand.vmem [shape: f32[32,1], index: 3, kind: input, shape index: {}]
  %s4 = inlined_call_operand.<no memory space> [shape: f32[1,1], index: 4, kind: input, shape index: {}]
  %s5 = inlined_call_operand.hbm [shape: f32[1,128], index: 5, kind: output, shape index: {}]
  %s6 = sld [smem:[#allocation0]]
  $region30: #{tpu_custom_call.1} parent=0
    _
  %s8 = ssub.s32 1, %s6
  %s9 = scalar_select 0, %s8, %s6
  %v10 = vstv %s4
  %11 = vst [vmem:[#allocation2] sm:$0x1] %v10
  $region1: #{tpu_custom_call.1} parent=0
    #allocation3 [shape = 'u8[512]{0}', space=vmem, size = 0x400, scoped, tag = 'output window, operand 0, single buffered']
    #allocation4 [shape = 's32[1]{0}', space=sflag, size = 0x4, scoped, tag = 'scoped memory for tpu_custom_call.1']
    %12 = vsyncpa [#allocation4], 0
    // Predicated region
    $region2: #{tpu_custom_call.1} parent=1 // pred_check
      _
    $region3: #{tpu_custom_call.1} parent=1 // pred_check_branch
      %14 = sbr.rel (0) target = $region5
    $region4: #{tpu_custom_call.1} parent=1 // pred_region
      _
    $region5: #{tpu_custom_call.1} parent=1 // pred_fallthru
      _
    // Predicated region
    $region6: #{tpu_custom_call.1} parent=1 // pred_check
      _
    $region7: #{tpu_custom_call.1} parent=1 // pred_check_branch
      %16 = sbr.rel (0) target = $region9
    $region8: #{tpu_custom_call.1} parent=1 // pred_region
      _
    $region9: #{tpu_custom_call.1} parent=1 // pred_fallthru
      _
    // Predicated region
    $region10: #{tpu_custom_call.1} parent=1 // pred_check
      _
    $region11: #{tpu_custom_call.1} parent=1 // pred_check_branch
      %18 = sbr.rel (0) target = $region13
    $region12: #{tpu_custom_call.1} parent=1 // pred_region
      _
    $region13: #{tpu_custom_call.1} parent=1 // pred_fallthru
      _
    // Predicated region
    $region14: #{tpu_custom_call.1} parent=1 // pred_check
      _
    $region15: #{tpu_custom_call.1} parent=1 // pred_check_branch
      %20 = sbr.rel (0) target = $region17
    $region16: #{tpu_custom_call.1} parent=1 // pred_region
      _
    $region17: #{tpu_custom_call.1} parent=1 // pred_fallthru
      _
    // Predicated region
    $region18: #{tpu_custom_call.1} parent=1 // pred_check
      _
    $region19: #{tpu_custom_call.1} parent=1 // pred_check_branch
      %22 = sbr.rel (0) target = $region21
    $region20: #{tpu_custom_call.1} parent=1 // pred_region
      _
    $region21: #{tpu_custom_call.1} parent=1 // pred_fallthru
      _
    %v23 = vld [vmem:[%s1] sm:$0xff]
    %v24 = vld [vmem:[%s1 + $0x8] sm:$0xff]
    %v25 = vld [vmem:[%s1 + $0x10] sm:$0xff]
    %v26 = vld [vmem:[%s1 + $0x18] sm:$0xff]
    %v27 = vld [vmem:[%s0] sm:$0xff]
    %v28 = vld [vmem:[%s0 + $0x8] sm:$0xff]
    %v29 = vld [vmem:[%s0 + $0x10] sm:$0xff]
    %v30 = vld [vmem:[%s0 + $0x18] sm:$0xff]
    %v31 = vld [vmem:[%s0 + $0x20] sm:$0xff]
    %v32 = vld [vmem:[%s0 + $0x28] sm:$0xff]
    %v33 = vld [vmem:[%s0 + $0x30] sm:$0xff]
    %v34 = vld [vmem:[%s0 + $0x38] sm:$0xff]
    %v35 = vld [vmem:[%s0 + $0x40] sm:$0xff]
    %v36 = vld [vmem:[%s0 + $0x48] sm:$0xff]
    %v37 = vld [vmem:[%s0 + $0x50] sm:$0xff]
    %v38 = vld [vmem:[%s0 + $0x58] sm:$0xff]
    %v39 = vld [vmem:[%s0 + $0x60] sm:$0xff]
    %v40 = vld [vmem:[%s0 + $0x68] sm:$0xff]
    %v41 = vld [vmem:[%s0 + $0x70] sm:$0xff]
    %v42 = vld [vmem:[%s0 + $0x78] sm:$0xff]
    %v43 = vld [vmem:[%s2] sm:$0xff]
    %v44 = vld [vmem:[%s2 + $0x8] sm:$0xff]
    %v45 = vld [vmem:[%s2 + $0x10] sm:$0xff]
    %v46 = vld [vmem:[%s2 + $0x18] sm:$0xff]
    %48 = vset.pattern.permute.xlu0 0
    %49 = vperm.xlu0 %48, %v43
    %v50 = vpop.permute.xlu0 %49
    %53 = vset.pattern.permute.xlu0 0
    %54 = vperm.xlu0 %53, %v44
    %v55 = vpop.permute.xlu0 %54
    %58 = vset.pattern.permute.xlu0 0
    %59 = vperm.xlu0 %58, %v45
    %v60 = vpop.permute.xlu0 %59
    %63 = vset.pattern.permute.xlu0 0
    %64 = vperm.xlu0 %63, %v46
    %v65 = vpop.permute.xlu0 %64
    %vm67 = vcmask 130048
    %v69 = vsel %vm67, %v23, 0
    %v72 = vsel %vm67, %v24, 0
    %v75 = vsel %vm67, %v25, 0
    %v78 = vsel %vm67, %v26, 0
    %v81 = vsel %vm67, %v27, 0
    %v84 = vsel %vm67, %v28, 0
    %v87 = vsel %vm67, %v29, 0
    %v90 = vsel %vm67, %v30, 0
    %v93 = vsel %vm67, %v31, 0
    %v96 = vsel %vm67, %v32, 0
    %v99 = vsel %vm67, %v33, 0
    %v102 = vsel %vm67, %v34, 0
    %v105 = vsel %vm67, %v35, 0
    %v108 = vsel %vm67, %v36, 0
    %v111 = vsel %vm67, %v37, 0
    %v114 = vsel %vm67, %v38, 0
    %v117 = vsel %vm67, %v39, 0
    %v120 = vsel %vm67, %v40, 0
    %v123 = vsel %vm67, %v41, 0
    %v126 = vsel %vm67, %v42, 0
    %128 = vmatpush.xpose.msra.mxu0 %v126
    %129 = vmatpush.xpose.msra.mxu0 %v123
    %130 = vmatpush.xpose.msra.mxu0 %v120
    %131 = vmatpush.xpose.msra.mxu0 %v117
    %132 = vmatpush.xpose.msra.mxu0 %v114
    %133 = vmatpush.xpose.msra.mxu0 %v111
    %134 = vmatpush.xpose.msra.mxu0 %v108
    %135 = vmatpush.xpose.msra.mxu0 %v105
    %136 = vmatpush.xpose.msra.mxu0 %v102
    %137 = vmatpush.xpose.msra.mxu0 %v99
    %138 = vmatpush.xpose.msra.mxu0 %v96
    %139 = vmatpush.xpose.msra.mxu0 %v93
    %140 = vmatpush.xpose.msra.mxu0 %v90
    %141 = vmatpush.xpose.msra.mxu0 %v87
    %142 = vmatpush.xpose.msra.mxu0 %v84
    %143 = vmatpush.xpose.msra.mxu0 %v81
    %144 = vmatmul.f32.gmra.mxu0 %v69
    %v145 = vpop.f32.mrf.mxu0
    %v146 = vadd.f32 %v50, %v145
    %147 = vmatmul.f32.gmra.mxu0 %v72
    %v148 = vpop.f32.mrf.mxu0
    %v149 = vadd.f32 %v55, %v148
    %150 = vmatmul.f32.gmra.mxu0 %v75
    %v151 = vpop.f32.mrf.mxu0
    %v152 = vadd.f32 %v60, %v151
    %153 = vmatmul.f32.gmra.mxu0 %v78
    %v154 = vpop.f32.mrf.mxu0
    %v155 = vadd.f32 %v65, %v154
    %156 = vdwg.mxu0
    %v157 = vmax.f32 %v146, 0.0
    %v158 = vmax.f32 %v149, 0.0
    %v159 = vmax.f32 %v152, 0.0
    %v160 = vmax.f32 %v155, 0.0
    %v161 = vld [vmem:[%s3] sm:$0xff]
    %v162 = vld [vmem:[%s3 + $0x8] sm:$0xff]
    %v163 = vld [vmem:[%s3 + $0x10] sm:$0xff]
    %v164 = vld [vmem:[%s3 + $0x18] sm:$0xff]
    %166 = vset.pattern.permute.xlu0 0
    %167 = vperm.xlu0 %166, %v161
    %v168 = vpop.permute.xlu0 %167
    %171 = vset.pattern.permute.xlu0 0
    %172 = vperm.xlu0 %171, %v162
    %v173 = vpop.permute.xlu0 %172
    %176 = vset.pattern.permute.xlu0 0
    %177 = vperm.xlu0 %176, %v163
    %v178 = vpop.permute.xlu0 %177
    %181 = vset.pattern.permute.xlu0 0
    %182 = vperm.xlu0 %181, %v164
    %v183 = vpop.permute.xlu0 %182
    %v185 = vmul.f32 %v157, %v168
    %v186 = vmul.f32 %v158, %v173
    %v187 = vmul.f32 %v159, %v178
    %v188 = vmul.f32 %v160, %v183
    %v189 = vadd.f32 %v185, %v186
    %v190 = vadd.f32 %v189, %v187
    %v191 = vadd.f32 %v190, %v188
    %v192 = vrot.slane %v191, 4
    %v193 = vadd.f32 %v191, %v192
    %v194 = vrot.slane %v193, 2
    %v195 = vadd.f32 %v193, %v194
    %v196 = vrot.slane %v195, 1
    %v197 = vadd.f32 %v195, %v196
    %v198 = vld [vmem:[#allocation2] sm:$0x1]
    %200 = vset.pattern.permute.xlu0 0
    %201 = vperm.xlu0 %200, %v198
    %v202 = vpop.permute.xlu0 %201
    %v204 = vperm.slane %v202, 0
    %v205 = vadd.f32 %v197, %v204
    %206 = vst [vmem:[#allocation3] sm:$0x1] %v205
    // Predicated region
    $region22: #{tpu_custom_call.1} parent=1 // pred_check
      _
    $region23: #{tpu_custom_call.1} parent=1 // pred_check_branch
      %208 = sbr.rel (0) target = $region25
    $region24: #{tpu_custom_call.1} parent=1 // pred_region
      %210 = vsyncadd [#allocation4], 0
      %s212 = sshll.u32 [#allocation3], 4
      %s213 = int_to_ptr.vmem [resolvable:$true] %s212
      %s214 = sshll.u32 %s5, 4
      %s215 = int_to_ptr.hbm [resolvable:$true] %s214
      %217 = dma.vmem_to_hbm [thread:$0]  %s213, 16, %s215, [#allocation4]
    $region25: #{tpu_custom_call.1} parent=1 // pred_fallthru
      _
    // Predicated region
    $region26: #{tpu_custom_call.1} parent=1 // pred_check
      _
    $region27: #{tpu_custom_call.1} parent=1 // pred_check_branch
      %219 = sbr.rel (0) target = $region29
    $region28: #{tpu_custom_call.1} parent=1 // pred_region
      %221 = dma.done [#allocation4], 16
    $region29: #{tpu_custom_call.1} parent=1 // pred_fallthru
      _
    %222 = vsyncpa [#allocation4], 1

</llo_original>
